<compile_context>
chip_gen: v7x
topology: tpu7x:2x2x1
jax: 0.10.0
libtpu: 0.0.40
codegen_flags: <defaults>
</compile_context>

<pallas_src>
import math

import jax
import jax.numpy as jnp
from jax.experimental import pallas as pl
from jax.experimental.pallas import tpu as pltpu


def _layer_scale_kernel(x_ref, g_ref, o_ref):
    # x_ref: (TM, L)   g_ref: (1, L)   o_ref: (TM, L)
    o_ref[...] = x_ref[...] * g_ref[...]


def _choose_tile_m(num_rows, row_elems, itemsize,
                   target_tile_bytes=4 * 1024 * 1024,
                   min_tile_bytes=1 * 1024 * 1024,
                   min_grid_steps=4):
    """Rows per tile: ~4 MiB of x per tile (double-buffered x+out => ~16 MiB
    VMEM, safe on all generations), but keep >= min_grid_steps steps when each
    step would still move >= ~1 MiB (lets v7x's 2 TCs split the M axis)."""
    row_bytes = max(1, row_elems * itemsize)
    rows = max(1, target_tile_bytes // row_bytes)
    min_rows = max(1, min_tile_bytes // row_bytes)
    quarter = -(-num_rows // min_grid_steps)          # cdiv
    rows = min(rows, max(min_rows, quarter))
    if rows >= num_rows:
        return num_rows                               # single full-extent block
    rows = max(8, (rows // 8) * 8)                    # sublane-aligned tile
    if rows >= num_rows:
        return num_rows
    return rows


def layer_scale_pallas(x2d, gamma):
    """x2d: (M, C) channels-last slab; gamma: (C,). Returns x2d * gamma."""
    M, C = x2d.shape
    gamma = gamma.astype(x2d.dtype)

    # Pick the kernel-facing view: lane-fold small / non-128-multiple C into a
    # wide lane dim when possible (free reshape, unmasked lane-dense stores),
    # otherwise use the full C as the block's last dim (legal, no padding).
    if C % 128 != 0:
        L = (C * 128) // math.gcd(C, 128)             # lcm(C, 128)
        fold = L // C
        if fold > 1 and M % fold == 0:
            x_k = x2d.reshape(M // fold, L)           # metadata-only reshape
            g_k = jnp.tile(gamma, fold).reshape(1, L)  # tiny (L elements)
        else:
            x_k = x2d
            g_k = gamma.reshape(1, C)
    else:
        x_k = x2d
        g_k = gamma.reshape(1, C)

    Rk, Lk = x_k.shape
    tile_m = _choose_tile_m(Rk, Lk, x_k.dtype.itemsize)
    grid = (pl.cdiv(Rk, tile_m),)                     # partial last block is clipped

    itemsize = x_k.dtype.itemsize
    out = pl.pallas_call(
        _layer_scale_kernel,
        out_shape=jax.ShapeDtypeStruct((Rk, Lk), x_k.dtype),
        grid_spec=pltpu.PrefetchScalarGridSpec(
            num_scalar_prefetch=0,
            grid=grid,
            in_specs=[
                pl.BlockSpec((tile_m, Lk), lambda i: (i, 0)),  # x: streams
                pl.BlockSpec((1, Lk), lambda i: (0, 0)),       # gamma: resident
            ],
            out_specs=pl.BlockSpec((tile_m, Lk), lambda i: (i, 0)),
        ),
        compiler_params=pltpu.CompilerParams(
            dimension_semantics=("parallel",),
            vmem_limit_bytes=32 * 1024 * 1024,
        ),
        cost_estimate=pl.CostEstimate(
            flops=M * C,
            transcendentals=0,
            bytes_accessed=2 * M * C * itemsize,
        ),
        input_output_aliases={0: 0},   # in-place semantics; no second HBM slab
    )(x_k, g_k)

    if out.shape != (M, C):
        out = out.reshape(M, C)        # metadata-only (undo lane fold)
    return out


class LayerScalePallas:
    """JAX/Pallas port of the slimmable LayerScale module."""

    def __init__(self, smallest_ratio, largest_ratio, dim,
                 init_values=1e-5, inplace=False):
        self.smallest_ratio = smallest_ratio
        self.largest_ratio = largest_ratio
        self.inplace = inplace
        self.dim = dim
        self.gamma = init_values * jnp.ones((dim,), jnp.float32)

    def _slice_gamma(self, ratio):
        dim_channels = int(ratio * self.dim)
        if ratio == self.smallest_ratio or ratio == self.largest_ratio:
            return self.gamma[:dim_channels]
        return self.gamma[-dim_channels:]

    def __call__(self, x, ratio):
        gamma = self._slice_gamma(ratio)

        if not self.inplace:
            # Faithful to the PyTorch module: with inplace=False the product
            # `x * gamma` is computed then discarded, and x is returned as-is.
            # TODO(synk): confirm this PyTorch quirk (discarded result) is the
            # intended semantics rather than a bug being faithfully copied.
            return x

        lead = x.shape[:-1]
        C = x.shape[-1]
        assert C == gamma.shape[0], "x channel dim must match sliced gamma"
        x2d = x.reshape(-1, C)
        out2d = layer_scale_pallas(x2d, gamma)
        return out2d.reshape(*lead, C)


if __name__ == "__main__":
    key = jax.random.PRNGKey(0)
    kx1, kx2, kx3, kg = jax.random.split(key, 4)

    dim = 64
    smallest_ratio, largest_ratio = 0.25, 1.0
    B, S = 2, 8

    ls = LayerScalePallas(smallest_ratio, largest_ratio, dim,
                          init_values=1e-5, inplace=True)
    # Non-constant gamma so the first-slice / last-slice branches are
    # numerically distinguishable.
    ls.gamma = jax.random.normal(kg, (dim,), jnp.float32)

    # --- ratio = 0.5: "last slice" branch, C=32 -> lane-folded to (M/4, 128) ---
    ratio = 0.5
    c = int(ratio * dim)
    x = jax.random.normal(kx1, (B, S, c), jnp.float32)
    out = jax.block_until_ready(ls(x, ratio))
    ref = x * ls.gamma[-c:]
    assert out.shape == x.shape
    assert jnp.allclose(out, ref, atol=1e-6, rtol=1e-6)

    # --- ratio = 1.0: "first slice" branch, C=64 -> lane-folded to (M/2, 128) ---
    ratio = 1.0
    c = int(ratio * dim)
    x_full = jax.random.normal(kx2, (B, S, c), jnp.float32)
    out_full = jax.block_until_ready(ls(x_full, ratio))
    ref_full = x_full * ls.gamma[:c]
    assert jnp.allclose(out_full, ref_full, atol=1e-6, rtol=1e-6)

    # --- non-foldable M (M=14, C=32, fold factor 4): full-C-block fallback ---
    x_odd = jax.random.normal(kx3, (2, 7, 32), jnp.float32)
    out_odd = jax.block_until_ready(ls(x_odd, 0.5))
    assert jnp.allclose(out_odd, x_odd * ls.gamma[-32:], atol=1e-6, rtol=1e-6)

    # --- inplace=False path: the original module returns x unchanged ---
    ls_noop = LayerScalePallas(smallest_ratio, largest_ratio, dim, inplace=False)
    y = ls_noop(x_full, 1.0)
    assert jnp.array_equal(y, x_full)

    print("KERNEL_OK")
</pallas_src>

<mosaic_0001>
module attributes {stable_mosaic.version = 11 : i64} {
  func.func @_layer_scale_kernel(%arg0: i32, %arg1: memref<4x128xf32, #tpu.memory_space<vmem>>, %arg2: memref<1x128xf32, #tpu.memory_space<vmem>>, %arg3: memref<4x128xf32, #tpu.memory_space<vmem>>) attributes {dimension_semantics = [#tpu.dimension_semantics<parallel>], iteration_bounds = array<i64: 1>, scalar_prefetch = 0 : i64, scratch_operands = 0 : i64, tpu.core_type = #tpu.core_type<tc>, window_params = [{transform_indices = @transform_0, window_bounds = array<i64: 4, 128>}, {pipeline_mode = #tpu.pipeline_mode<synchronous>, transform_indices = @transform_1, window_bounds = array<i64: 1, 128>}, {transform_indices = @transform_2, window_bounds = array<i64: 4, 128>}]} {
    %c0 = arith.constant 0 : index
    %c0_0 = arith.constant 0 : index
    %0 = vector.load %arg1[%c0, %c0_0] : memref<4x128xf32, #tpu.memory_space<vmem>>, vector<4x128xf32>
    %c0_1 = arith.constant 0 : index
    %c0_2 = arith.constant 0 : index
    %1 = vector.load %arg2[%c0_1, %c0_2] : memref<1x128xf32, #tpu.memory_space<vmem>>, vector<1x128xf32>
    %2 = vector.broadcast %1 : vector<1x128xf32> to vector<4x128xf32>
    %3 = arith.mulf %0, %2 : vector<4x128xf32>
    %c0_3 = arith.constant 0 : index
    %c0_4 = arith.constant 0 : index
    %4 = vector.load %arg3[%c0_3, %c0_4] : memref<4x128xf32, #tpu.memory_space<vmem>>, vector<4x128xf32>
    tpu.vector_store %arg3[%c0_3, %c0_4], %3 {strides = array<i32>} : memref<4x128xf32, #tpu.memory_space<vmem>>, vector<4x128xf32>,
    return
  }
  func.func @transform_0(%arg0: i32) -> (i32, i32) {
    %c0_i32 = arith.constant 0 : i32
    %c0_i32_0 = arith.constant 0 : i32
    return %arg0, %c0_i32 : i32, i32
  }
  func.func @transform_1(%arg0: i32) -> (i32, i32) {
    %c0_i32 = arith.constant 0 : i32
    %c0_i32_0 = arith.constant 0 : i32
    %c0_i32_1 = arith.constant 0 : i32
    return %c0_i32, %c0_i32_0 : i32, i32
  }
  func.func @transform_2(%arg0: i32) -> (i32, i32) {
    %c0_i32 = arith.constant 0 : i32
    %c0_i32_0 = arith.constant 0 : i32
    return %arg0, %c0_i32 : i32, i32
  }
}

</mosaic_0001>

<llo_original>
// kernel: tpu_custom_call.1
$region0: #{tpu_custom_call.1}
  #allocation0 [shape = 'u32[]', space=smem, size = 0x4, offset = 0x4, fixed_abs, tag = 'smem constant byte address 0x4 - core index']
  #allocation1 [shape = 'u32[144,128]{1,0:T(1,128)}', space=vmem, size = 0x12000, scoped, tag = 'internal scratch']
  %s0 = inlined_call_operand.hbm [shape: f32[4,128], index: 0, kind: input, shape index: {}, may-alias: {0,2}]
  %s1 = inlined_call_operand.vmem [shape: f32[1,128], index: 1, kind: input, shape index: {}]
  %s2 = inlined_call_operand.hbm [shape: f32[4,128], index: 2, kind: output, shape index: {}, may-alias: {0,2}]
  %s3 = sld [smem:[#allocation0]]
  $region22: #{tpu_custom_call.1} parent=0
    _
  %s5 = ssub.s32 1, %s3
  %s6 = scalar_select 0, %s5, %s3
  $region1: #{tpu_custom_call.1} parent=0
    #allocation2 [shape = 'u8[2048]{0}', space=vmem, size = 0x800, scoped, tag = 'input window, operand 0, single buffered']
    #allocation3 [shape = 's32[1]{0}', space=sflag, size = 0x4, scoped, tag = 'scoped memory for tpu_custom_call.1']
    #allocation4 [shape = 's32[1]{0}', space=sflag, size = 0x4, scoped, tag = 'scoped memory for tpu_custom_call.1']
    #allocation5 [shape = 'u8[2048]{0}', space=vmem, size = 0x800, scoped, tag = 'output window, operand 0, single buffered']
    %7 = vsyncpa [#allocation3], 0
    %8 = vsyncpa [#allocation4], 0
    // Predicated region
    $region2: #{tpu_custom_call.1} parent=1 // pred_check
      _
    $region3: #{tpu_custom_call.1} parent=1 // pred_check_branch
      %10 = sbr.rel (0) target = $region5
    $region4: #{tpu_custom_call.1} parent=1 // pred_region
      %s12 = ssub.s32 64, 64
      %13 = vsyncadd [#allocation3], %s12
      %s15 = sshll.u32 [#allocation2], 4
      %s16 = int_to_ptr.vmem [resolvable:$true] %s15
      %18 = dma.hbm_to_vmem [thread:$0]  %s0, 64, %s16, [#allocation3]
    $region5: #{tpu_custom_call.1} parent=1 // pred_fallthru
      _
    // Predicated region
    $region6: #{tpu_custom_call.1} parent=1 // pred_check
      _
    $region7: #{tpu_custom_call.1} parent=1 // pred_check_branch
      %20 = sbr.rel (0) target = $region9
    $region8: #{tpu_custom_call.1} parent=1 // pred_region
      _
    $region9: #{tpu_custom_call.1} parent=1 // pred_fallthru
      _
    // Predicated region
    $region10: #{tpu_custom_call.1} parent=1 // pred_check
      _
    $region11: #{tpu_custom_call.1} parent=1 // pred_check_branch
      %22 = sbr.rel (0) target = $region13
    $region12: #{tpu_custom_call.1} parent=1 // pred_region
      %23 = dma.done [#allocation3], 64
    $region13: #{tpu_custom_call.1} parent=1 // pred_fallthru
      _
    %v24 = vld [vmem:[#allocation2] sm:$0xf]
    %v25 = vld [vmem:[%s1] sm:$0x1]
    %v27 = vlaneseq
    %v28 = vshrl.u32 %v27, 7
    %v29 = vsub.s32 0, %v28
    %v30 = vrot.slane %v25, %v29
    %v32 = vmul.f32 %v24, %v30
    %33 = vst [vmem:[#allocation5] sm:$0xf] %v32
    // Predicated region
    $region14: #{tpu_custom_call.1} parent=1 // pred_check
      _
    $region15: #{tpu_custom_call.1} parent=1 // pred_check_branch
      %35 = sbr.rel (0) target = $region17
    $region16: #{tpu_custom_call.1} parent=1 // pred_region
      %s37 = ssub.s32 64, 64
      %38 = vsyncadd [#allocation4], %s37
      %s40 = sshll.u32 [#allocation5], 4
      %s41 = int_to_ptr.vmem [resolvable:$true] %s40
      %43 = dma.vmem_to_hbm [thread:$0]  %s41, 64, %s2, [#allocation4]
    $region17: #{tpu_custom_call.1} parent=1 // pred_fallthru
      _
    // Predicated region
    $region18: #{tpu_custom_call.1} parent=1 // pred_check
      _
    $region19: #{tpu_custom_call.1} parent=1 // pred_check_branch
      %45 = sbr.rel (0) target = $region21
    $region20: #{tpu_custom_call.1} parent=1 // pred_region
      %46 = dma.done [#allocation4], 64
    $region21: #{tpu_custom_call.1} parent=1 // pred_fallthru
      _
    %47 = vsyncpa [#allocation3], 1
    %48 = vsyncpa [#allocation4], 1

</llo_original>
